<compile_context>
chip_gen: v7x
topology: tpu7x:2x2x1
jax: 0.10.0
libtpu: 0.0.40
codegen_flags: <defaults>
</compile_context>

<pallas_src>
import jax
import jax.numpy as jnp
from jax.experimental import pallas as pl
from jax.experimental.pallas import tpu as pltpu

_LANE = 128                              # vreg lane width
_SUBLANE = 8                             # vreg sublane count (32-bit rows)
_BLOCK_BUDGET_BYTES = 8 * 1024 * 1024    # per-input-block VMEM budget
_HW_TILE_FLOOR = 4 * _LANE               # >= 512 lanes when HW allows


def _round_up(a: int, m: int) -> int:
    return ((a + m - 1) // m) * m


def _sublane_pack(itemsize: int) -> int:
    # Rows of packed dtypes travel in groups: f32 -> 8, bf16 -> 16, int8/fp8 -> 32.
    return _SUBLANE * max(4 // max(int(itemsize), 1), 1)


def _vmem_limit_bytes() -> int:
    # Defensive per-generation scoped-VMEM request: half of physical VMEM,
    # clamped to [16 MiB, 64 MiB]. Falls back to 32 MiB (safe on v5e/v6e/v7x).
    try:
        cap = int(pltpu.get_tpu_info().vmem_capacity_bytes)
    except Exception:
        cap = 64 * 1024 * 1024
    return min(max(cap // 2, 16 * 1024 * 1024), 64 * 1024 * 1024)


_VMEM_LIMIT_BYTES = _vmem_limit_bytes()


def _choose_tiles(B: int, C: int, HW: int, itemsize: int):
    """Pick (b_tile, c_tile, hw_tile) against the padded-VMEM block budget."""
    pack = _sublane_pack(itemsize)
    budget = max(_BLOCK_BUDGET_BYTES // int(itemsize), pack * _LANE)  # elems
    hw_pad = _round_up(HW, _LANE)     # lane-padded spatial footprint
    c_pad = _round_up(C, pack)        # sublane-padded channel footprint

    hw_floor = min(hw_pad, _HW_TILE_FLOOR)

    if c_pad * hw_floor <= budget:
        # Full channel extent fits in one block: single reduction step.
        c_tile = C
        c_foot = c_pad
    else:
        # Large C: keep the spatial tile at the floor, tile the reduction.
        # c_foot is a multiple of `pack` and strictly < C here.
        c_foot = max(((budget // hw_floor) // pack) * pack, pack)
        c_tile = c_foot

    # Spatial tile: grow to fill the budget; multiple of 128 or the full HW.
    hw_tile = max(((budget // c_foot) // _LANE) * _LANE, _LANE)
    if hw_tile >= hw_pad:
        hw_tile = HW                  # full spatial extent in one block
        hw_foot = hw_pad
    else:
        hw_foot = hw_tile

    # Fold batch elements when one (C, HW) slab is small, so each grid step
    # moves enough bytes to amortize the ~0.35us per-step overhead.
    b_tile = 1
    if c_tile == C and hw_tile == HW:
        per_b = c_foot * hw_foot
        b_tile = min(max(budget // per_b, 1), B)
        # Keep >= 2 blocks along a parallel axis for v7x's two TensorCores.
        if b_tile >= B and B >= 2:
            b_tile = (B + 1) // 2
    return b_tile, c_tile, hw_tile


def _gmp_kernel_2d(x_ref, o_ref):
    # Full channel extent in one block: single VPU max over axis 1.
    o_ref[...] = jnp.max(x_ref[...], axis=1, keepdims=True)


def _make_gmp_kernel_3d(c_rem: int):
    """Tiled-C kernel. `c_rem` = valid channels in the LAST reduction block."""

    def kernel(x_ref, o_ref):
        # x_ref: (b_tile, c_tile, hw_tile); o_ref: (b_tile, 1, hw_tile).
        # The output block is resident across the innermost ("arbitrary") C
        # axis and acts as the accumulator; max in the output dtype is exact.
        k = pl.program_id(2)
        last = pl.num_programs(2) - 1   # nk >= 2 on this path

        @pl.when(k == 0)
        def _():
            o_ref[...] = jnp.max(x_ref[...], axis=1, keepdims=True)

        @pl.when((k > 0) & (k < last))
        def _():
            o_ref[...] = jnp.maximum(
                o_ref[...], jnp.max(x_ref[...], axis=1, keepdims=True))

        @pl.when(k == last)
        def _():
            # Static slice to the valid channel tail: boundary-block rows past
            # C are unspecified and must not contaminate the max.
            o_ref[...] = jnp.maximum(
                o_ref[...],
                jnp.max(x_ref[:, :c_rem, :], axis=1, keepdims=True))

    return kernel


@jax.jit
def global_max_pool(x: jax.Array) -> jax.Array:
    """Max over axis=1 with keepdim: (B, C, H, W) -> (B, 1, H, W)."""
    B, C, H, W = x.shape
    HW = H * W
    itemsize = jnp.dtype(x.dtype).itemsize
    b_tile, c_tile, hw_tile = _choose_tiles(B, C, HW, itemsize)

    x3 = x.reshape(B, C, HW)
    nb = pl.cdiv(B, b_tile)
    ns = pl.cdiv(HW, hw_tile)
    nk = pl.cdiv(C, c_tile)

    out_shape = jax.ShapeDtypeStruct((B, 1, HW), x.dtype)

    if nk == 1:
        # Common case: full-C reduction in one block, 2-D grid, both axes
        # independent (megacore-shardable).
        out = pl.pallas_call(
            _gmp_kernel_2d,
            out_shape=out_shape,
            grid_spec=pltpu.PrefetchScalarGridSpec(
                num_scalar_prefetch=0,
                grid=(nb, ns),
                in_specs=[pl.BlockSpec((b_tile, c_tile, hw_tile),
                                       lambda b, s: (b, 0, s))],
                out_specs=pl.BlockSpec((b_tile, 1, hw_tile),
                                       lambda b, s: (b, 0, s)),
            ),
            compiler_params=pltpu.CompilerParams(
                dimension_semantics=("parallel", "parallel"),
                vmem_limit_bytes=_VMEM_LIMIT_BYTES,
            ),
        )(x3)
    else:
        # Large C: reduction axis innermost + "arbitrary"; output block
        # resident across it as the accumulator.
        c_rem = C - (nk - 1) * c_tile
        out = pl.pallas_call(
            _make_gmp_kernel_3d(c_rem),
            out_shape=out_shape,
            grid_spec=pltpu.PrefetchScalarGridSpec(
                num_scalar_prefetch=0,
                grid=(nb, ns, nk),
                in_specs=[pl.BlockSpec((b_tile, c_tile, hw_tile),
                                       lambda b, s, k: (b, k, s))],
                out_specs=pl.BlockSpec((b_tile, 1, hw_tile),
                                       lambda b, s, k: (b, 0, s)),
            ),
            compiler_params=pltpu.CompilerParams(
                dimension_semantics=("parallel", "parallel", "arbitrary"),
                vmem_limit_bytes=_VMEM_LIMIT_BYTES,
            ),
        )(x3)

    return out.reshape(B, 1, H, W)


if __name__ == "__main__":
    key = jax.random.PRNGKey(0)
    k0, k1, k2, k3 = jax.random.split(key, 4)

    # 1) Small NCHW input consistent with the module's forward (2-D grid path).
    x = jax.random.normal(k0, (2, 4, 16, 16), dtype=jnp.float32)
    out = jax.block_until_ready(global_max_pool(x))
    ref = jnp.max(x, axis=1, keepdims=True)
    assert out.shape == (2, 1, 16, 16), out.shape
    assert jnp.allclose(out, ref), "mismatch vs reference (f32 small)"

    # 2) Odd spatial / channel dims (H*W not a multiple of 128): full-dim
    #    blocks, no wrapper-side padding.
    x2 = jax.random.normal(k1, (2, 5, 9, 11), dtype=jnp.float32)
    out2 = jax.block_until_ready(global_max_pool(x2))
    ref2 = jnp.max(x2, axis=1, keepdims=True)
    assert out2.shape == (2, 1, 9, 11), out2.shape
    assert jnp.allclose(out2, ref2), "mismatch vs reference (odd dims)"

    # 3) bf16 path (dtype-aware sublane-pack tiling).
    x3 = jax.random.normal(k2, (2, 4, 16, 16), dtype=jnp.bfloat16)
    out3 = jax.block_until_ready(global_max_pool(x3))
    ref3 = jnp.max(x3, axis=1, keepdims=True)
    assert out3.shape == (2, 1, 16, 16), out3.shape
    assert jnp.array_equal(out3, ref3), "mismatch vs reference (bf16)"

    # 4) Large-C input exercising the tiled-reduction path with a ragged C
    #    tail (in-kernel static slice) and a ragged spatial boundary block.
    x4 = jax.random.normal(k3, (1, 4200, 24, 24), dtype=jnp.float32)
    out4 = jax.block_until_ready(global_max_pool(x4))
    ref4 = jnp.max(x4, axis=1, keepdims=True)
    assert out4.shape == (1, 1, 24, 24), out4.shape
    assert jnp.allclose(out4, ref4), "mismatch vs reference (tiled C)"

    print("KERNEL_OK")
</pallas_src>

<mosaic_0001>
module attributes {stable_mosaic.version = 11 : i64} {
  func.func @_gmp_kernel_2d(%arg0: i32, %arg1: i32, %arg2: memref<1x4x256xf32, #tpu.memory_space<vmem>>, %arg3: memref<1x1x256xf32, #tpu.memory_space<vmem>>) attributes {dimension_semantics = [#tpu.dimension_semantics<parallel>, #tpu.dimension_semantics<parallel>], iteration_bounds = array<i64: 2, 1>, scalar_prefetch = 0 : i64, scratch_operands = 0 : i64, tpu.core_type = #tpu.core_type<tc>, window_params = [{transform_indices = @transform_0, window_bounds = array<i64: 1, 4, 256>}, {transform_indices = @transform_1, window_bounds = array<i64: 1, 1, 256>}]} {
    %c0 = arith.constant 0 : index
    %c0_0 = arith.constant 0 : index
    %c0_1 = arith.constant 0 : index
    %0 = vector.load %arg2[%c0, %c0_0, %c0_1] : memref<1x4x256xf32, #tpu.memory_space<vmem>>, vector<1x4x256xf32>
    %cst = arith.constant dense<0xFF800000> : vector<1x256xf32>
    %1 = vector.multi_reduction <maximumf>, %0, %cst [1] : vector<1x4x256xf32> to vector<1x256xf32>
    %2 = vector.shape_cast %1 : vector<1x256xf32> to vector<1x1x256xf32>
    %c0_2 = arith.constant 0 : index
    %c0_3 = arith.constant 0 : index
    %c0_4 = arith.constant 0 : index
    %3 = vector.load %arg3[%c0_2, %c0_3, %c0_4] : memref<1x1x256xf32, #tpu.memory_space<vmem>>, vector<1x1x256xf32>
    tpu.vector_store %arg3[%c0_2, %c0_3, %c0_4], %2 {strides = array<i32>} : memref<1x1x256xf32, #tpu.memory_space<vmem>>, vector<1x1x256xf32>,
    return
  }
  func.func @transform_0(%arg0: i32, %arg1: i32) -> (i32, i32, i32) {
    %c0_i32 = arith.constant 0 : i32
    %c0_i32_0 = arith.constant 0 : i32
    return %arg0, %c0_i32, %arg1 : i32, i32, i32
  }
  func.func @transform_1(%arg0: i32, %arg1: i32) -> (i32, i32, i32) {
    %c0_i32 = arith.constant 0 : i32
    %c0_i32_0 = arith.constant 0 : i32
    return %arg0, %c0_i32, %arg1 : i32, i32, i32
  }
}

</mosaic_0001>

<llo_original>
// kernel: global_max_pool.1
$region0: #{global_max_pool.1}
  #allocation0 [shape = 'u32[]', space=smem, size = 0x4, offset = 0x4, fixed_abs, tag = 'smem constant byte address 0x4 - core index']
  #allocation1 [shape = 'u32[144,128]{1,0:T(1,128)}', space=vmem, size = 0x12000, scoped, tag = 'internal scratch']
  %s0 = inlined_call_operand.vmem [shape: f32[2,4,256], index: 0, kind: input, shape index: {}]
  %s1 = inlined_call_operand.vmem [shape: f32[2,1,256], index: 1, kind: output, shape index: {}]
  %s2 = sld [smem:[#allocation0]]
  $region37: #{global_max_pool.1} parent=0
    _
  %s4 = ssub.s32 1, %s2
  %s5 = scalar_select 0, %s4, %s2
  loop: start=0, step=1, limit=4
  $region2: #{global_max_pool.1} parent=0 // loop_pre_header
    _
  $region3: #{global_max_pool.1} parent=0 // loop_header
    %s7 = sphi 0, %s11
    %p8 = scmp.ge.s32.totalorder %s7, 4
    %s14 = sphi 0, %s26
    %s15 = sphi 0, %s22
    %s16 = sphi 0, %s14
    %s17 = sphi 0, %s15
    %s18 = sphi 0, %s16
    %s19 = sphi 0, %s17
    %s31 = sphi 0, %s33
    %s34 = sphi 0, %s31
    %s35 = sphi 0, %s34
    %s51 = sphi 0, %s35
    %s59 = sphi 0, %s61
    %s62 = sphi 0, %s59
    %s63 = sphi 0, %s62
    %s79 = sphi 0, %s63
  $region4: #{global_max_pool.1} parent=0 // loop_header_branch
    %10 = sbr.rel (%p8) target = $region8
  $region5: #{global_max_pool.1} parent=0 // loop_body
    %s12 = ssub.s32 %s7, 1
    %s13 = ssub.s32 %s7, 2
    %s20 = sadd.s32 1, %s15
    %p21 = scmp.ge.s32.totalorder %s20, 1
    %s22 = scalar_select %p21, 0, %s20
    %s23 = sadd.s32 1, %s14
    %s24 = scalar_select %p21, %s23, %s14
    %p25 = scmp.ge.s32.totalorder %s24, 2
    %s26 = scalar_select %p25, 0, %s24
    %s27 = ssub.s32 %s14, %s26
    %s28 = ssub.s32 %s15, %s22
    %s29 = sor.u32 %s27, %s28
    %p30 = scmp.eq.s32.totalorder %s29, 0
    %s32 = sadd.s32 %s31, 1
    %s33 = scalar_select %p30, %s31, %s32
    %p36 = pneg %p30
    %p37 = scmp.eq.s32.totalorder %s7, 1
    %p38 = por %p36, %p37
    %p39 = scmp.ne.s32.totalorder %s31, %s34
    %p40 = scmp.eq.s32.totalorder %s7, 0
    %p41 = por %p39, %p40
    %p42 = scmp.ne.s32.totalorder %s31, %s34
    %p43 = scmp.eq.s32.totalorder %s12, 1
    %p44 = por %p42, %p43
    %p45 = scmp.ne.s32.totalorder %s34, %s35
    %p46 = scmp.eq.s32.totalorder %s12, 0
    %p47 = por %p45, %p46
    %p48 = scmp.ne.s32.totalorder %s34, %s35
    %p49 = scmp.eq.s32.totalorder %s13, 1
    %p50 = por %p48, %p49
    %p52 = scmp.ne.s32.totalorder %s35, %s51
    %p53 = scmp.eq.s32.totalorder %s13, 0
    %p54 = por %p52, %p53
    %s55 = ssub.s32 %s14, %s26
    %s56 = ssub.s32 %s15, %s22
    %s57 = sor.u32 %s55, %s56
    %p58 = scmp.eq.s32.totalorder %s57, 0
    %s60 = sadd.s32 %s59, 1
    %s61 = scalar_select %p58, %s59, %s60
    %p64 = pneg %p58
    %p65 = scmp.eq.s32.totalorder %s7, 1
    %p66 = por %p64, %p65
    %p67 = scmp.ne.s32.totalorder %s59, %s62
    %p68 = scmp.eq.s32.totalorder %s7, 0
    %p69 = por %p67, %p68
    %p70 = scmp.ne.s32.totalorder %s59, %s62
    %p71 = scmp.eq.s32.totalorder %s12, 1
    %p72 = por %p70, %p71
    %p73 = scmp.ne.s32.totalorder %s62, %s63
    %p74 = scmp.eq.s32.totalorder %s12, 0
    %p75 = por %p73, %p74
    %p76 = scmp.ne.s32.totalorder %s62, %s63
    %p77 = scmp.eq.s32.totalorder %s13, 1
    %p78 = por %p76, %p77
    %p80 = scmp.ne.s32.totalorder %s63, %s79
    %p81 = scmp.eq.s32.totalorder %s13, 0
    %p82 = por %p80, %p81
    %p83 = scmp.le.s32.totalorder 1, %s7
    %p84 = scmp.lt.s32.totalorder %s7, 3
    %p85 = pnand %p83, %p84
    %p86 = pneg %p85
    // Predicated region
    $region9: #{global_max_pool.1} parent=5 // pred_check
      _
    $region10: #{global_max_pool.1} parent=5 // pred_check_branch
      %88 = sbr.rel (%p85) target = $region12
    $region11: #{global_max_pool.1} parent=5 // pred_region
      %s89 = ssub.s32 %s7, 1
    $region12: #{global_max_pool.1} parent=5 // pred_fallthru
      _
    %p90 = scmp.lt.s32.totalorder %s7, 2
    // Predicated region
    $region13: #{global_max_pool.1} parent=5 // pred_check
      %p91 = pneg %p90
    $region14: #{global_max_pool.1} parent=5 // pred_check_branch
      %93 = sbr.rel (%p91) target = $region16
    $region15: #{global_max_pool.1} parent=5 // pred_region
      // Predicated region
      $region17: #{global_max_pool.1} parent=15 // pred_check
        %p94 = pneg %p41
      $region18: #{global_max_pool.1} parent=15 // pred_check_branch
        %96 = sbr.rel (%p94) target = $region20
      $region19: #{global_max_pool.1} parent=15 // pred_region
        %s97 = smul.u32 2, %s15
        %p98 = scmp.lt.s32.totalorder %s14, 1
        %s99 = scalar_select %p98, %s14, 1
        %p100 = scmp.lt.s32.totalorder %s97, 1
        %s101 = scalar_select %p100, %s97, 1
        %s102 = smul.addr %s99, 2
        %s103 = sadd.s32 %s101, %s102
        %s104 = smul.addr %s103, 4
        %s105 = scalar_lea.vmem %s0, %s104
        %s106 = smul.u32 2, %s15
      $region20: #{global_max_pool.1} parent=15 // pred_fallthru
        _
    $region16: #{global_max_pool.1} parent=5 // pred_fallthru
      _
    %p107 = scmp.le.s32.totalorder 1, %s7
    %p108 = scmp.lt.s32.totalorder %s7, 3
    %p109 = pnand %p107, %p108
    %p110 = pneg %p109
    // Predicated region
    $region21: #{global_max_pool.1} parent=5 // pred_check
      _
    $region22: #{global_max_pool.1} parent=5 // pred_check_branch
      %112 = sbr.rel (%p109) target = $region24
    $region23: #{global_max_pool.1} parent=5 // pred_region
      %s113 = ssub.s32 %s7, 1
      %s114 = smul.u32 2, %s17
      %p115 = scmp.lt.s32.totalorder %s16, 1
      %s116 = scalar_select %p115, %s16, 1
      %p117 = scmp.lt.s32.totalorder %s114, 1
      %s118 = scalar_select %p117, %s114, 1
      %s119 = smul.addr %s116, 2
      %s120 = sadd.s32 %s118, %s119
      %s121 = smul.addr %s120, 4
      %s122 = scalar_lea.vmem %s0, %s121
      %p123 = pneg %p47
      %p124 = pneg %p44
      %p125 = pneg %p75
      %p126 = pneg %p72
      %s127 = smul.u32 2, %s17
      %p128 = scmp.lt.s32.totalorder %s16, 1
      %s129 = scalar_select %p128, %s16, 1
      %p130 = scmp.lt.s32.totalorder %s127, 1
      %s131 = scalar_select %p130, %s127, 1
      %s132 = smul.addr %s129, 2
      %s133 = sadd.s32 %s131, %s132
      %s134 = scalar_lea.vmem %s1, %s133
      %s135 = smul.u32 2, %s17
      %p136 = scmp.lt.s32.totalorder %s16, 1
      %s137 = scalar_select %p136, %s16, 1
      %p138 = scmp.lt.s32.totalorder %s135, 1
      %s139 = scalar_select %p138, %s135, 1
      %s140 = smul.addr %s137, 2
      %s141 = sadd.s32 %s139, %s140
      %s142 = smul.addr %s141, 4
      %s143 = scalar_lea.vmem %s0, %s142
      %s144 = smul.u32 2, %s17
      %s145 = smul.u32 2, %s17
      %p146 = scmp.lt.s32.totalorder %s16, 1
      %s147 = scalar_select %p146, %s16, 1
      %p148 = scmp.lt.s32.totalorder %s145, 1
      %s149 = scalar_select %p148, %s145, 1
      %s150 = smul.addr %s147, 2
      %s151 = sadd.s32 %s149, %s150
      %s152 = scalar_lea.vmem %s1, %s151
      %s153 = smul.u32 2, %s17
      %v154 = vld [vmem:[%s143] sm:$0xff]
      %v156 = vcombine.high %v154, %v154
      %vm158 = vcmask 1043456
      %v159 = vsel %vm158, %v154, -inf
      %v160 = vrot.slane %v159, 4
      %v161 = vmax.f32 %v159, %v160
      %v162 = vrot.slane %v161, 2
      %v163 = vmax.f32 %v161, %v162
      %v164 = vrot.slane %v163, 1
      %v165 = vmax.f32 %v163, %v164
      %v166 = vsel %vm158, %v156, -inf
      %v167 = vrot.slane %v166, 4
      %v168 = vmax.f32 %v166, %v167
      %v169 = vrot.slane %v168, 2
      %v170 = vmax.f32 %v168, %v169
      %v171 = vrot.slane %v170, 1
      %v172 = vmax.f32 %v170, %v171
      %v175 = vcombine.low %v165, %v172
      %v177 = vunpack.c.l.s4 1966171168
      %v178 = vunpack.c.0.s8 %v177
      %v179 = vlaneseq
      %v180 = vshrl.u32 %v179, 7
      %v181 = vsub.s32 %v178, %v180
      %v182 = vrot.slane %v175, %v181
      %v184 = vunpack.c.l.s4 1966171168
      %v185 = vunpack.c.0.s8 %v184
      %v186 = vlaneseq
      %v187 = vshrl.u32 %v186, 7
      %v188 = vsub.s32 %v185, %v187
      %v189 = vrot.slane %v182, %v188
      %v191 = vlaneseq
      %vm192 = vcmp.ge.s32.totalorder %v191, 0
      %vm193 = vcmp.lt.s32.totalorder %v191, 256
      %vm194 = vmand %vm192, %vm193
      %195 = vst.msk [vmem:[%s152] sm:$0x3] %vm194, %v189
      %s196 = smul.u32 2, %s17
      %p197 = scmp.lt.s32.totalorder %s16, 1
      %s198 = scalar_select %p197, %s16, 1
      %p199 = scmp.lt.s32.totalorder %s196, 1
      %s200 = scalar_select %p199, %s196, 1
      %s201 = smul.addr %s198, 2
      %s202 = sadd.s32 %s200, %s201
      %s203 = scalar_lea.vmem %s1, %s202
      // Predicated region
      $region25: #{global_max_pool.1} parent=23 // pred_check
        %p204 = pneg %p72
      $region26: #{global_max_pool.1} parent=23 // pred_check_branch
        %206 = sbr.rel (%p204) target = $region28
      $region27: #{global_max_pool.1} parent=23 // pred_region
        %s207 = smul.u32 2, %s17
      $region28: #{global_max_pool.1} parent=23 // pred_fallthru
        _
    $region24: #{global_max_pool.1} parent=5 // pred_fallthru
      _
    %p208 = scmp.le.s32.totalorder 2, %s7
    // Predicated region
    $region29: #{global_max_pool.1} parent=5 // pred_check
      %p209 = pneg %p208
    $region30: #{global_max_pool.1} parent=5 // pred_check_branch
      %211 = sbr.rel (%p209) target = $region32
    $region31: #{global_max_pool.1} parent=5 // pred_region
      %s212 = ssub.s32 %s7, 2
      // Predicated region
      $region33: #{global_max_pool.1} parent=31 // pred_check
        %p213 = pneg %p78
      $region34: #{global_max_pool.1} parent=31 // pred_check_branch
        %215 = sbr.rel (%p213) target = $region36
      $region35: #{global_max_pool.1} parent=31 // pred_region
        %s216 = smul.u32 2, %s19
        %p217 = scmp.lt.s32.totalorder %s18, 1
        %s218 = scalar_select %p217, %s18, 1
        %p219 = scmp.lt.s32.totalorder %s216, 1
        %s220 = scalar_select %p219, %s216, 1
        %s221 = smul.addr %s218, 2
        %s222 = sadd.s32 %s220, %s221
        %s223 = scalar_lea.vmem %s1, %s222
      $region36: #{global_max_pool.1} parent=31 // pred_fallthru
        _
    $region32: #{global_max_pool.1} parent=5 // pred_fallthru
      _
  $region6: #{global_max_pool.1} parent=0 // loop_footer
    %s11 = sadd.s32 1, %s7
  $region7: #{global_max_pool.1} parent=0 // loop_footer_branch
    %6 = sbr.rel target = $region3
  $region8: #{global_max_pool.1} parent=0 // loop_exit
    _

</llo_original>
